<compile_context>
chip_gen: v7x
topology: tpu7x:2x2x1
jax: 0.10.0
libtpu: 0.0.40
codegen_flags: <defaults>
</compile_context>

<pallas_src>
import functools

import jax
import jax.numpy as jnp
from jax.experimental import pallas as pl
from jax.experimental.pallas import tpu as pltpu

HIDDEN = 256  # fixed by the PyTorch module (nn.Linear(dim_state, 256), etc.)
LANE = 128    # TPU lane width; lane-dense output padding target


def _round_up(x, m):
    return ((x + m - 1) // m) * m


def _actor_kernel(x_ref, w1_ref, b1_ref, w2_ref, b2_ref, w3_ref, b3_ref, out_ref):
    # fc1: cast x to the weight dtype (bf16) in-kernel; MXU matmul accumulates in f32.
    x = x_ref[...].astype(w1_ref.dtype)
    h = jnp.dot(x, w1_ref[...], preferred_element_type=jnp.float32)
    # bias + relu + bf16 cast fused: the (tile, 256) intermediate is materialized once,
    # in bf16, so any VMEM spill between matmuls moves half the bytes.
    h = jnp.maximum(h + b1_ref[...], 0.0).astype(w2_ref.dtype)
    # fc2 + relu.
    h = jnp.dot(h, w2_ref[...], preferred_element_type=jnp.float32)
    h = jnp.maximum(h + b2_ref[...], 0.0).astype(w3_ref.dtype)
    # out + tanh: w3/b3 are lane-padded to 128 columns in the wrapper, so this store is a
    # full unmasked (tile, 128) vst instead of a 4/128-lane masked vst.msk.
    a = jnp.dot(h, w3_ref[...], preferred_element_type=jnp.float32)
    out_ref[...] = jnp.tanh(a + b3_ref[...]).astype(out_ref.dtype)


def _default_batch_tile(batch):
    """Step-count-aware tile choice.

    v5e/v6e have one TensorCore, so extra grid steps only add ~0.35us each of fixed
    overhead for this tiny kernel -> one step for small/medium batches.  Only large
    batches (padded > 512) are streamed in 256-row tiles, which the "parallel" batch
    axis lets megacore (v7x) shard across its two TensorCores.
    Tiles are multiples of 16 so bf16 (16,128) sublane packing stays clean.
    """
    padded = _round_up(batch, 16)
    if padded <= 512:
        return padded
    return 256


def prepare_actor_params(params, *, use_bf16=True):
    """One-time weight prep: cast matmul operands to bf16 and lane-pad the output layer.

    w3: [256, dim_action] -> [256, 128] (zero-padded), b3 likewise; the padded lanes
    produce tanh(0)=0 and are sliced off after the call.  Do this ONCE and reuse the
    returned tuple every forward call (avoids per-call convert ops).
    """
    w1, b1, w2, b2, w3, b3 = params
    cdtype = jnp.bfloat16 if use_bf16 else jnp.float32
    dim_action = w3.shape[1]
    out_width = _round_up(max(dim_action, LANE), LANE)
    w3p = jnp.zeros((w3.shape[0], out_width), cdtype).at[:, :dim_action].set(w3.astype(cdtype))
    b3p = jnp.zeros((1, out_width), jnp.float32).at[:, :dim_action].set(b3.astype(jnp.float32))
    return (w1.astype(cdtype), b1.astype(jnp.float32),
            w2.astype(cdtype), b2.astype(jnp.float32),
            w3p, b3p)


@functools.partial(jax.jit, static_argnames=("dim_action", "batch_tile"))
def actor_forward(x, prepared_params, *, dim_action, batch_tile=None):
    """x: [B, dim_state] float32; prepared_params from prepare_actor_params().

    Returns [B, dim_action] float32.
    """
    w1, b1, w2, b2, w3, b3 = prepared_params
    B, dim_state = x.shape
    hidden = w1.shape[1]
    out_width = w3.shape[1]  # lane-padded (multiple of 128)

    if batch_tile is None:
        batch_tile = _default_batch_tile(B)
    padded_b = _round_up(B, batch_tile)
    if padded_b != B:
        # Pad only when the batch isn't tile-aligned (padded rows are sliced off below).
        x = jnp.pad(x, ((0, padded_b - B), (0, 0)))

    grid = (padded_b // batch_tile,)
    out = pl.pallas_call(
        _actor_kernel,
        out_shape=jax.ShapeDtypeStruct((padded_b, out_width), jnp.float32),
        grid_spec=pltpu.PrefetchScalarGridSpec(
            num_scalar_prefetch=0,
            grid=grid,
            in_specs=[
                # x tile streams with the grid; cast to bf16 happens inside the kernel.
                pl.BlockSpec((batch_tile, dim_state), lambda i: (i, 0)),
                # Weights/biases: constant block index -> resident in VMEM across steps.
                # TODO(synk): pipeline_mode=pl.Buffered(1) would drop the unused second
                # buffer (~140 KiB total); negligible at hidden=256, omitted for robustness.
                pl.BlockSpec((dim_state, hidden), lambda i: (0, 0)),   # w1
                pl.BlockSpec((1, hidden), lambda i: (0, 0)),           # b1
                pl.BlockSpec((hidden, hidden), lambda i: (0, 0)),      # w2
                pl.BlockSpec((1, hidden), lambda i: (0, 0)),           # b2
                pl.BlockSpec((hidden, out_width), lambda i: (0, 0)),   # w3 (lane-padded)
                pl.BlockSpec((1, out_width), lambda i: (0, 0)),        # b3 (lane-padded)
            ],
            out_specs=pl.BlockSpec((batch_tile, out_width), lambda i: (i, 0)),
        ),
        compiler_params=pltpu.CompilerParams(
            # Batch axis is independent; shards across v7x's two TCs when grid > 1.
            dimension_semantics=("parallel",),
        ),
    )(x, w1, b1, w2, b2, w3, b3)
    return out[:B, :dim_action]


def init_actor_params(key, dim_state, dim_action, hidden=HIDDEN):
    """Deterministic init matching nn.Linear default (uniform +-1/sqrt(fan_in))."""
    def linear(k, fan_in, fan_out):
        kw, kb = jax.random.split(k)
        bound = 1.0 / jnp.sqrt(jnp.float32(fan_in))
        # stored as [in, out] so the kernel computes x @ W
        w = jax.random.uniform(kw, (fan_in, fan_out), jnp.float32, -bound, bound)
        b = jax.random.uniform(kb, (1, fan_out), jnp.float32, -bound, bound)
        return w, b

    k1, k2, k3 = jax.random.split(key, 3)
    w1, b1 = linear(k1, dim_state, hidden)
    w2, b2 = linear(k2, hidden, hidden)
    w3, b3 = linear(k3, hidden, dim_action)
    return (w1, b1, w2, b2, w3, b3)


def actor_ref(x, params, use_bf16=False):
    """Pure-JAX reference of the PyTorch forward (optionally bf16 matmul operands)."""
    w1, b1, w2, b2, w3, b3 = params
    cdtype = jnp.bfloat16 if use_bf16 else jnp.float32
    h = jax.nn.relu(
        jnp.dot(x.astype(cdtype), w1.astype(cdtype), preferred_element_type=jnp.float32) + b1)
    h = jax.nn.relu(
        jnp.dot(h.astype(cdtype), w2.astype(cdtype), preferred_element_type=jnp.float32) + b2)
    return jnp.tanh(
        jnp.dot(h.astype(cdtype), w3.astype(cdtype), preferred_element_type=jnp.float32) + b3)


if __name__ == "__main__":
    key = jax.random.PRNGKey(0)
    kx, kp = jax.random.split(key)

    batch, dim_state, dim_action = 8, 16, 4
    x = jax.random.normal(kx, (batch, dim_state), dtype=jnp.float32)
    params = init_actor_params(kp, dim_state, dim_action)

    # Default path: bf16 matmul operands, prepared (cast + lane-pad) once, reused per call.
    p_bf16 = prepare_actor_params(params, use_bf16=True)
    out = jax.block_until_ready(actor_forward(x, p_bf16, dim_action=dim_action))
    assert out.shape == (batch, dim_action)

    # Tight check vs. a matched-precision bf16 reference; loose vs. pure-f32 PyTorch math.
    ref_bf16 = actor_ref(x, params, use_bf16=True)
    ref_f32 = actor_ref(x, params, use_bf16=False)
    assert jnp.allclose(out, ref_bf16, atol=2e-3, rtol=2e-3), "mismatch vs bf16 reference"
    assert jnp.allclose(out, ref_f32, atol=5e-2), "mismatch vs f32 reference"

    # Padding / lane-slice path (odd batch) in pure f32 -> tight match to f32 reference.
    p_f32 = prepare_actor_params(params, use_bf16=False)
    x_odd = jax.random.normal(kx, (13, dim_state), dtype=jnp.float32)
    out_odd = jax.block_until_ready(actor_forward(x_odd, p_f32, dim_action=dim_action))
    assert out_odd.shape == (13, dim_action)
    assert jnp.allclose(out_odd, actor_ref(x_odd, params), atol=1e-5, rtol=1e-5)

    print("KERNEL_OK")
</pallas_src>

<mosaic_0001>
module attributes {stable_mosaic.version = 11 : i64} {
  func.func @_actor_kernel(%arg0: i32, %arg1: memref<16x16xf32, #tpu.memory_space<vmem>>, %arg2: memref<16x256xbf16, #tpu.memory_space<vmem>>, %arg3: memref<1x256xf32, #tpu.memory_space<vmem>>, %arg4: memref<256x256xbf16, #tpu.memory_space<vmem>>, %arg5: memref<1x256xf32, #tpu.memory_space<vmem>>, %arg6: memref<256x128xbf16, #tpu.memory_space<vmem>>, %arg7: memref<1x128xf32, #tpu.memory_space<vmem>>, %arg8: memref<16x128xf32, #tpu.memory_space<vmem>>) attributes {dimension_semantics = [#tpu.dimension_semantics<parallel>], iteration_bounds = array<i64: 1>, scalar_prefetch = 0 : i64, scratch_operands = 0 : i64, tpu.core_type = #tpu.core_type<tc>, window_params = [{transform_indices = @transform_0, window_bounds = array<i64: 16, 16>}, {pipeline_mode = #tpu.pipeline_mode<synchronous>, transform_indices = @transform_1, window_bounds = array<i64: 16, 256>}, {pipeline_mode = #tpu.pipeline_mode<synchronous>, transform_indices = @transform_2, window_bounds = array<i64: 1, 256>}, {pipeline_mode = #tpu.pipeline_mode<synchronous>, transform_indices = @transform_3, window_bounds = array<i64: 256, 256>}, {pipeline_mode = #tpu.pipeline_mode<synchronous>, transform_indices = @transform_4, window_bounds = array<i64: 1, 256>}, {pipeline_mode = #tpu.pipeline_mode<synchronous>, transform_indices = @transform_5, window_bounds = array<i64: 256, 128>}, {pipeline_mode = #tpu.pipeline_mode<synchronous>, transform_indices = @transform_6, window_bounds = array<i64: 1, 128>}, {transform_indices = @transform_7, window_bounds = array<i64: 16, 128>}]} {
    %c0 = arith.constant 0 : index
    %c0_0 = arith.constant 0 : index
    %0 = vector.load %arg1[%c0, %c0_0] : memref<16x16xf32, #tpu.memory_space<vmem>>, vector<16x16xf32>
    %1 = arith.truncf %0 : vector<16x16xf32> to vector<16x16xbf16>
    %c0_1 = arith.constant 0 : index
    %c0_2 = arith.constant 0 : index
    %2 = vector.load %arg2[%c0_1, %c0_2] : memref<16x256xbf16, #tpu.memory_space<vmem>>, vector<16x256xbf16>
    %cst = arith.constant dense<0.000000e+00> : vector<16x256xf32>
    %3 = tpu.matmul %1, %2, %cst {dimension_numbers = #tpu.dot_dimension_numbers<[1], [0], [0], [1], [0, 0, 1, 1], [], []>} : vector<16x16xbf16>, vector<16x256xbf16>, vector<16x256xf32> -> vector<16x256xf32>
    %c0_3 = arith.constant 0 : index
    %c0_4 = arith.constant 0 : index
    %4 = vector.load %arg3[%c0_3, %c0_4] : memref<1x256xf32, #tpu.memory_space<vmem>>, vector<1x256xf32>
    %5 = vector.broadcast %4 : vector<1x256xf32> to vector<16x256xf32>
    %6 = arith.addf %3, %5 : vector<16x256xf32>
    %cst_5 = arith.constant 0.000000e+00 : f32
    %7 = vector.broadcast %cst_5 : f32 to vector<16x256xf32>
    %8 = arith.maximumf %6, %7 : vector<16x256xf32>
    %9 = arith.truncf %8 : vector<16x256xf32> to vector<16x256xbf16>
    %c0_6 = arith.constant 0 : index
    %c0_7 = arith.constant 0 : index
    %10 = vector.load %arg4[%c0_6, %c0_7] : memref<256x256xbf16, #tpu.memory_space<vmem>>, vector<256x256xbf16>
    %cst_8 = arith.constant dense<0.000000e+00> : vector<16x256xf32>
    %11 = tpu.matmul %9, %10, %cst_8 {dimension_numbers = #tpu.dot_dimension_numbers<[1], [0], [0], [1], [0, 0, 1, 1], [], []>} : vector<16x256xbf16>, vector<256x256xbf16>, vector<16x256xf32> -> vector<16x256xf32>
    %c0_9 = arith.constant 0 : index
    %c0_10 = arith.constant 0 : index
    %12 = vector.load %arg5[%c0_9, %c0_10] : memref<1x256xf32, #tpu.memory_space<vmem>>, vector<1x256xf32>
    %13 = vector.broadcast %12 : vector<1x256xf32> to vector<16x256xf32>
    %14 = arith.addf %11, %13 : vector<16x256xf32>
    %cst_11 = arith.constant 0.000000e+00 : f32
    %15 = vector.broadcast %cst_11 : f32 to vector<16x256xf32>
    %16 = arith.maximumf %14, %15 : vector<16x256xf32>
    %17 = arith.truncf %16 : vector<16x256xf32> to vector<16x256xbf16>
    %c0_12 = arith.constant 0 : index
    %c0_13 = arith.constant 0 : index
    %18 = vector.load %arg6[%c0_12, %c0_13] : memref<256x128xbf16, #tpu.memory_space<vmem>>, vector<256x128xbf16>
    %cst_14 = arith.constant dense<0.000000e+00> : vector<16x128xf32>
    %19 = tpu.matmul %17, %18, %cst_14 {dimension_numbers = #tpu.dot_dimension_numbers<[1], [0], [0], [1], [0, 0, 1, 1], [], []>} : vector<16x256xbf16>, vector<256x128xbf16>, vector<16x128xf32> -> vector<16x128xf32>
    %c0_15 = arith.constant 0 : index
    %c0_16 = arith.constant 0 : index
    %20 = vector.load %arg7[%c0_15, %c0_16] : memref<1x128xf32, #tpu.memory_space<vmem>>, vector<1x128xf32>
    %21 = vector.broadcast %20 : vector<1x128xf32> to vector<16x128xf32>
    %22 = arith.addf %19, %21 : vector<16x128xf32>
    %23 = math.tanh %22 : vector<16x128xf32>
    %c0_17 = arith.constant 0 : index
    %c0_18 = arith.constant 0 : index
    %24 = vector.load %arg8[%c0_17, %c0_18] : memref<16x128xf32, #tpu.memory_space<vmem>>, vector<16x128xf32>
    tpu.vector_store %arg8[%c0_17, %c0_18], %23 {strides = array<i32>} : memref<16x128xf32, #tpu.memory_space<vmem>>, vector<16x128xf32>,
    return
  }
  func.func @transform_0(%arg0: i32) -> (i32, i32) {
    %c0_i32 = arith.constant 0 : i32
    %c0_i32_0 = arith.constant 0 : i32
    return %arg0, %c0_i32 : i32, i32
  }
  func.func @transform_1(%arg0: i32) -> (i32, i32) {
    %c0_i32 = arith.constant 0 : i32
    %c0_i32_0 = arith.constant 0 : i32
    %c0_i32_1 = arith.constant 0 : i32
    return %c0_i32, %c0_i32_0 : i32, i32
  }
  func.func @transform_2(%arg0: i32) -> (i32, i32) {
    %c0_i32 = arith.constant 0 : i32
    %c0_i32_0 = arith.constant 0 : i32
    %c0_i32_1 = arith.constant 0 : i32
    return %c0_i32, %c0_i32_0 : i32, i32
  }
  func.func @transform_3(%arg0: i32) -> (i32, i32) {
    %c0_i32 = arith.constant 0 : i32
    %c0_i32_0 = arith.constant 0 : i32
    %c0_i32_1 = arith.constant 0 : i32
    return %c0_i32, %c0_i32_0 : i32, i32
  }
  func.func @transform_4(%arg0: i32) -> (i32, i32) {
    %c0_i32 = arith.constant 0 : i32
    %c0_i32_0 = arith.constant 0 : i32
    %c0_i32_1 = arith.constant 0 : i32
    return %c0_i32, %c0_i32_0 : i32, i32
  }
  func.func @transform_5(%arg0: i32) -> (i32, i32) {
    %c0_i32 = arith.constant 0 : i32
    %c0_i32_0 = arith.constant 0 : i32
    %c0_i32_1 = arith.constant 0 : i32
    return %c0_i32, %c0_i32_0 : i32, i32
  }
  func.func @transform_6(%arg0: i32) -> (i32, i32) {
    %c0_i32 = arith.constant 0 : i32
    %c0_i32_0 = arith.constant 0 : i32
    %c0_i32_1 = arith.constant 0 : i32
    return %c0_i32, %c0_i32_0 : i32, i32
  }
  func.func @transform_7(%arg0: i32) -> (i32, i32) {
    %c0_i32 = arith.constant 0 : i32
    %c0_i32_0 = arith.constant 0 : i32
    return %arg0, %c0_i32 : i32, i32
  }
}

</mosaic_0001>

<llo_original>
// kernel: actor_forward.1
$region0: #{actor_forward.1}
  #allocation0 [shape = 'u32[]', space=smem, size = 0x4, offset = 0x4, fixed_abs, tag = 'smem constant byte address 0x4 - core index']
  #allocation1 [shape = 'u32[144,128]{1,0:T(1,128)}', space=vmem, size = 0x12000, scoped, tag = 'internal scratch']
  %s0 = inlined_call_operand.vmem [shape: f32[16,16], index: 0, kind: input, shape index: {}]
  %s1 = inlined_call_operand.vmem [shape: bf16[16,256], index: 1, kind: input, shape index: {}]
  %s2 = inlined_call_operand.vmem [shape: f32[1,256], index: 2, kind: input, shape index: {}]
  %s3 = inlined_call_operand.hbm [shape: bf16[256,256], index: 3, kind: input, shape index: {}]
  %s4 = inlined_call_operand.vmem [shape: f32[1,256], index: 4, kind: input, shape index: {}]
  %s5 = inlined_call_operand.hbm [shape: bf16[256,128], index: 5, kind: input, shape index: {}]
  %s6 = inlined_call_operand.vmem [shape: f32[1,128], index: 6, kind: input, shape index: {}]
  %s7 = inlined_call_operand.vmem [shape: f32[16,128], index: 7, kind: output, shape index: {}]
  %s8 = sld [smem:[#allocation0]]
  $region46: #{actor_forward.1} parent=0
    _
  %s10 = ssub.s32 1, %s8
  %s11 = scalar_select 0, %s10, %s8
  $region1: #{actor_forward.1} parent=0
    #allocation2 [shape = 'u8[131072]{0}', space=vmem, size = 0x20000, scoped, tag = 'input window, operand 3, single buffered']
    #allocation3 [shape = 's32[1]{0}', space=sflag, size = 0x4, scoped, tag = 'scoped memory for actor_forward.1']
    #allocation4 [shape = 'u8[65536]{0}', space=vmem, size = 0x10000, scoped, tag = 'input window, operand 5, single buffered']
    #allocation5 [shape = 's32[1]{0}', space=sflag, size = 0x4, scoped, tag = 'scoped memory for actor_forward.1']
    %12 = vsyncpa [#allocation3], 0
    %13 = vsyncpa [#allocation5], 0
    // Predicated region
    $region2: #{actor_forward.1} parent=1 // pred_check
      _
    $region3: #{actor_forward.1} parent=1 // pred_check_branch
      %15 = sbr.rel (0) target = $region5
    $region4: #{actor_forward.1} parent=1 // pred_region
      _
    $region5: #{actor_forward.1} parent=1 // pred_fallthru
      _
    // Predicated region
    $region6: #{actor_forward.1} parent=1 // pred_check
      _
    $region7: #{actor_forward.1} parent=1 // pred_check_branch
      %17 = sbr.rel (0) target = $region9
    $region8: #{actor_forward.1} parent=1 // pred_region
      _
    $region9: #{actor_forward.1} parent=1 // pred_fallthru
      _
    // Predicated region
    $region10: #{actor_forward.1} parent=1 // pred_check
      _
    $region11: #{actor_forward.1} parent=1 // pred_check_branch
      %19 = sbr.rel (0) target = $region13
    $region12: #{actor_forward.1} parent=1 // pred_region
      _
    $region13: #{actor_forward.1} parent=1 // pred_fallthru
      _
    // Predicated region
    $region14: #{actor_forward.1} parent=1 // pred_check
      _
    $region15: #{actor_forward.1} parent=1 // pred_check_branch
      %21 = sbr.rel (0) target = $region17
    $region16: #{actor_forward.1} parent=1 // pred_region
      %s23 = ssub.s32 4096, 4096
      %24 = vsyncadd [#allocation3], %s23
      %s25 = sshll.u32 [#allocation2], 4
      %s26 = int_to_ptr.vmem [resolvable:$true] %s25
      %31 = dma.hbm_to_vmem [thread:$0]  %s3, 4096, %s26, [#allocation3], 128, 128, 8
    $region17: #{actor_forward.1} parent=1 // pred_fallthru
      _
    // Predicated region
    $region18: #{actor_forward.1} parent=1 // pred_check
      _
    $region19: #{actor_forward.1} parent=1 // pred_check_branch
      %33 = sbr.rel (0) target = $region21
    $region20: #{actor_forward.1} parent=1 // pred_region
      _
    $region21: #{actor_forward.1} parent=1 // pred_fallthru
      _
    // Predicated region
    $region22: #{actor_forward.1} parent=1 // pred_check
      _
    $region23: #{actor_forward.1} parent=1 // pred_check_branch
      %35 = sbr.rel (0) target = $region25
    $region24: #{actor_forward.1} parent=1 // pred_region
      %s37 = ssub.s32 2048, 2048
      %38 = vsyncadd [#allocation5], %s37
      %s39 = sshll.u32 [#allocation4], 4
      %s40 = int_to_ptr.vmem [resolvable:$true] %s39
      %45 = dma.hbm_to_vmem [thread:$0]  %s5, 2048, %s40, [#allocation5], 64, 64, 4
    $region25: #{actor_forward.1} parent=1 // pred_fallthru
      _
    // Predicated region
    $region26: #{actor_forward.1} parent=1 // pred_check
      _
    $region27: #{actor_forward.1} parent=1 // pred_check_branch
      %47 = sbr.rel (0) target = $region29
    $region28: #{actor_forward.1} parent=1 // pred_region
      _
    $region29: #{actor_forward.1} parent=1 // pred_fallthru
      _
    // Predicated region
    $region30: #{actor_forward.1} parent=1 // pred_check
      _
    $region31: #{actor_forward.1} parent=1 // pred_check_branch
      %49 = sbr.rel (0) target = $region33
    $region32: #{actor_forward.1} parent=1 // pred_region
      %50 = dma.done [#allocation3], 4096
    $region33: #{actor_forward.1} parent=1 // pred_fallthru
      _
    // Predicated region
    $region34: #{actor_forward.1} parent=1 // pred_check
      _
    $region35: #{actor_forward.1} parent=1 // pred_check_branch
      %52 = sbr.rel (0) target = $region37
    $region36: #{actor_forward.1} parent=1 // pred_region
      %53 = dma.done [#allocation5], 2048
    $region37: #{actor_forward.1} parent=1 // pred_fallthru
      _
    %v55 = vld [vmem:[%s0] sm:$0xff]
    %v56 = vld [vmem:[%s0 + $0x8] sm:$0xff]
    %v57 = vpack.c.bf16 %v56, %v55
    %v58 = vld [vmem:[%s1] sm:$0xff]
    %v59 = vld [vmem:[%s1 + $0x8] sm:$0xff]
    %v60 = vld [vmem:[%s2] sm:$0x3]
    %v62 = vlaneseq
    %v63 = vshrl.u32 %v62, 7
    %v64 = vsub.s32 0, %v63
    %v65 = vrot.slane %v60, %v64
    %v66 = vlaneseq
    %v67 = vshrl.u32 %v66, 7
    %v68 = vsub.s32 1, %v67
    %v69 = vrot.slane %v60, %v68
    %v74 = vunpack.c.l.b16 %v58
    %v75 = vunpack.c.h.b16 %v58
    %v76 = vunpack.c.l.b16 %v59
    %v77 = vunpack.c.h.b16 %v59
    %v78 = vpack.c.b16 %v76, %v74
    %v79 = vpack.c.b16 %v77, %v75
    %vm82 = vcmask 130048
    %v84 = vsel %vm82, %v57, 0
    %86 = vmatprep.subr.bf16.mxu0 %v79
    %87 = vmatpush1.bf16.msra.mxu0 %v78
    %88 = vmatprep.subr.bf16.mxu0 0
    %89 = vmatpush1.bf16.msra.mxu0 0
    %90 = vmatprep.subr.bf16.mxu0 0
    %91 = vmatpush1.bf16.msra.mxu0 0
    %92 = vmatprep.subr.bf16.mxu0 0
    %93 = vmatpush1.bf16.msra.mxu0 0
    %94 = vmatprep.subr.bf16.mxu0 0
    %95 = vmatpush1.bf16.msra.mxu0 0
    %96 = vmatprep.subr.bf16.mxu0 0
    %97 = vmatpush1.bf16.msra.mxu0 0
    %98 = vmatprep.subr.bf16.mxu0 0
    %99 = vmatpush1.bf16.msra.mxu0 0
    %100 = vmatprep.subr.bf16.mxu0 0
    %101 = vmatpush1.bf16.msra.mxu0 0
    %102 = vmatprep.subr.bf16.mxu0 0
    %103 = vmatpush1.bf16.msra.mxu0 0
    %104 = vmatprep.subr.bf16.mxu0 0
    %105 = vmatpush1.bf16.msra.mxu0 0
    %106 = vmatprep.subr.bf16.mxu0 0
    %107 = vmatpush1.bf16.msra.mxu0 0
    %108 = vmatprep.subr.bf16.mxu0 0
    %109 = vmatpush1.bf16.msra.mxu0 0
    %110 = vmatprep.subr.bf16.mxu0 0
    %111 = vmatpush1.bf16.msra.mxu0 0
    %112 = vmatprep.subr.bf16.mxu0 0
    %113 = vmatpush1.bf16.msra.mxu0 0
    %114 = vmatprep.subr.bf16.mxu0 0
    %115 = vmatpush1.bf16.msra.mxu0 0
    %116 = vmatprep.subr.bf16.mxu0 0
    %117 = vmatpush1.bf16.msra.mxu0 0
    %118 = vmatprep.mubr.bf16.mxu0 0
    %119 = vmatmul.mubr.bf16.gmra.mrb[0].mxu0 %v84
    %v120 = vpop.f32.mrb[0].mxu0
    %v121 = vadd.f32 %v65, %v120
    %v122 = vpop.f32.mrb[0].mxu0
    %v123 = vadd.f32 %v69, %v122
    %v124 = vpop.f32.mrb[0].mxu0
    %v125 = vadd.f32 %v65, %v124
    %v126 = vpop.f32.mrb[0].mxu0
    %v127 = vadd.f32 %v69, %v126
    %128 = vdwg.mxu0
    %v129 = vmax.f32 %v121, 0.0
    %v130 = vmax.f32 %v123, 0.0
    %v131 = vmax.f32 %v125, 0.0
    %v132 = vmax.f32 %v127, 0.0
    %v133 = vpack.c.bf16 %v131, %v129
    %v134 = vpack.c.bf16 %v132, %v130
    %v135 = vld [vmem:[#allocation2] sm:$0xff]
    %v136 = vld [vmem:[#allocation2 + $0x8] sm:$0xff]
    %v137 = vld [vmem:[#allocation2 + $0x10] sm:$0xff]
    %v138 = vld [vmem:[#allocation2 + $0x18] sm:$0xff]
    %v139 = vld [vmem:[#allocation2 + $0x20] sm:$0xff]
    %v140 = vld [vmem:[#allocation2 + $0x28] sm:$0xff]
    %v141 = vld [vmem:[#allocation2 + $0x30] sm:$0xff]
    %v142 = vld [vmem:[#allocation2 + $0x38] sm:$0xff]
    %v143 = vld [vmem:[#allocation2 + $0x40] sm:$0xff]
    %v144 = vld [vmem:[#allocation2 + $0x48] sm:$0xff]
    %v145 = vld [vmem:[#allocation2 + $0x50] sm:$0xff]
    %v146 = vld [vmem:[#allocation2 + $0x58] sm:$0xff]
    %v147 = vld [vmem:[#allocation2 + $0x60] sm:$0xff]
    %v148 = vld [vmem:[#allocation2 + $0x68] sm:$0xff]
    %v149 = vld [vmem:[#allocation2 + $0x70] sm:$0xff]
    %v150 = vld [vmem:[#allocation2 + $0x78] sm:$0xff]
    %v151 = vld [vmem:[#allocation2 + $0x80] sm:$0xff]
    %v152 = vld [vmem:[#allocation2 + $0x88] sm:$0xff]
    %v153 = vld [vmem:[#allocation2 + $0x90] sm:$0xff]
    %v154 = vld [vmem:[#allocation2 + $0x98] sm:$0xff]
    %v155 = vld [vmem:[#allocation2 + $0xa0] sm:$0xff]
    %v156 = vld [vmem:[#allocation2 + $0xa8] sm:$0xff]
    %v157 = vld [vmem:[#allocation2 + $0xb0] sm:$0xff]
    %v158 = vld [vmem:[#allocation2 + $0xb8] sm:$0xff]
    %v159 = vld [vmem:[#allocation2 + $0xc0] sm:$0xff]
    %v160 = vld [vmem:[#allocation2 + $0xc8] sm:$0xff]
    %v161 = vld [vmem:[#allocation2 + $0xd0] sm:$0xff]
    %v162 = vld [vmem:[#allocation2 + $0xd8] sm:$0xff]
    %v163 = vld [vmem:[#allocation2 + $0xe0] sm:$0xff]
    %v164 = vld [vmem:[#allocation2 + $0xe8] sm:$0xff]
    %v165 = vld [vmem:[#allocation2 + $0xf0] sm:$0xff]
    %v166 = vld [vmem:[#allocation2 + $0xf8] sm:$0xff]
    %v167 = vld [vmem:[%s4] sm:$0x3]
    %v169 = vlaneseq
    %v170 = vshrl.u32 %v169, 7
    %v171 = vsub.s32 0, %v170
    %v172 = vrot.slane %v167, %v171
    %v173 = vlaneseq
    %v174 = vshrl.u32 %v173, 7
    %v175 = vsub.s32 1, %v174
    %v176 = vrot.slane %v167, %v175
    %v211 = vunpack.c.l.b16 %v135
    %v212 = vunpack.c.h.b16 %v135
    %v213 = vunpack.c.l.b16 %v136
    %v214 = vunpack.c.h.b16 %v136
    %v215 = vunpack.c.l.b16 %v137
    %v216 = vunpack.c.h.b16 %v137
    %v217 = vunpack.c.l.b16 %v138
    %v218 = vunpack.c.h.b16 %v138
    %v219 = vunpack.c.l.b16 %v139
    %v220 = vunpack.c.h.b16 %v139
    %v221 = vunpack.c.l.b16 %v140
    %v222 = vunpack.c.h.b16 %v140
    %v223 = vunpack.c.l.b16 %v141
    %v224 = vunpack.c.h.b16 %v141
    %v225 = vunpack.c.l.b16 %v142
    %v226 = vunpack.c.h.b16 %v142
    %v227 = vunpack.c.l.b16 %v143
    %v228 = vunpack.c.h.b16 %v143
    %v229 = vunpack.c.l.b16 %v144
    %v230 = vunpack.c.h.b16 %v144
    %v231 = vunpack.c.l.b16 %v145
    %v232 = vunpack.c.h.b16 %v145
    %v233 = vunpack.c.l.b16 %v146
    %v234 = vunpack.c.h.b16 %v146
    %v235 = vunpack.c.l.b16 %v147
    %v236 = vunpack.c.h.b16 %v147
    %v237 = vunpack.c.l.b16 %v148
    %v238 = vunpack.c.h.b16 %v148
    %v239 = vunpack.c.l.b16 %v149
    %v240 = vunpack.c.h.b16 %v149
    %v241 = vunpack.c.l.b16 %v150
    %v242 = vunpack.c.h.b16 %v150
    %v243 = vunpack.c.l.b16 %v151
    %v244 = vunpack.c.h.b16 %v151
    %v245 = vunpack.c.l.b16 %v152
    %v246 = vunpack.c.h.b16 %v152
    %v247 = vunpack.c.l.b16 %v153
    %v248 = vunpack.c.h.b16 %v153
    %v249 = vunpack.c.l.b16 %v154
    %v250 = vunpack.c.h.b16 %v154
    %v251 = vunpack.c.l.b16 %v155
    %v252 = vunpack.c.h.b16 %v155
    %v253 = vunpack.c.l.b16 %v156
    %v254 = vunpack.c.h.b16 %v156
    %v255 = vunpack.c.l.b16 %v157
    %v256 = vunpack.c.h.b16 %v157
    %v257 = vunpack.c.l.b16 %v158
    %v258 = vunpack.c.h.b16 %v158
    %v259 = vunpack.c.l.b16 %v159
    %v260 = vunpack.c.h.b16 %v159
    %v261 = vunpack.c.l.b16 %v160
    %v262 = vunpack.c.h.b16 %v160
    %v263 = vunpack.c.l.b16 %v161
    %v264 = vunpack.c.h.b16 %v161
    %v265 = vunpack.c.l.b16 %v162
    %v266 = vunpack.c.h.b16 %v162
    %v267 = vunpack.c.l.b16 %v163
    %v268 = vunpack.c.h.b16 %v163
    %v269 = vunpack.c.l.b16 %v164
    %v270 = vunpack.c.h.b16 %v164
    %v271 = vunpack.c.l.b16 %v165
    %v272 = vunpack.c.h.b16 %v165
    %v273 = vunpack.c.l.b16 %v166
    %v274 = vunpack.c.h.b16 %v166
    %v275 = vpack.c.b16 %v213, %v211
    %v276 = vpack.c.b16 %v214, %v212
    %v277 = vpack.c.b16 %v217, %v215
    %v278 = vpack.c.b16 %v218, %v216
    %v279 = vpack.c.b16 %v221, %v219
    %v280 = vpack.c.b16 %v222, %v220
    %v281 = vpack.c.b16 %v225, %v223
    %v282 = vpack.c.b16 %v226, %v224
    %v283 = vpack.c.b16 %v229, %v227
    %v284 = vpack.c.b16 %v230, %v228
    %v285 = vpack.c.b16 %v233, %v231
    %v286 = vpack.c.b16 %v234, %v232
    %v287 = vpack.c.b16 %v237, %v235
    %v288 = vpack.c.b16 %v238, %v236
    %v289 = vpack.c.b16 %v241, %v239
    %v290 = vpack.c.b16 %v242, %v240
    %v291 = vpack.c.b16 %v245, %v243
    %v292 = vpack.c.b16 %v246, %v244
    %v293 = vpack.c.b16 %v249, %v247
    %v294 = vpack.c.b16 %v250, %v248
    %v295 = vpack.c.b16 %v253, %v251
    %v296 = vpack.c.b16 %v254, %v252
    %v297 = vpack.c.b16 %v257, %v255
    %v298 = vpack.c.b16 %v258, %v256
    %v299 = vpack.c.b16 %v261, %v259
    %v300 = vpack.c.b16 %v262, %v260
    %v301 = vpack.c.b16 %v265, %v263
    %v302 = vpack.c.b16 %v266, %v264
    %v303 = vpack.c.b16 %v269, %v267
    %v304 = vpack.c.b16 %v270, %v268
    %v305 = vpack.c.b16 %v273, %v271
    %v306 = vpack.c.b16 %v274, %v272
    %339 = vmatprep.subr.bf16.mxu0 %v276
    %340 = vmatpush1.bf16.msra.mxu0 %v275
    %341 = vmatprep.subr.bf16.mxu0 %v278
    %342 = vmatpush1.bf16.msra.mxu0 %v277
    %343 = vmatprep.subr.bf16.mxu0 %v280
    %344 = vmatpush1.bf16.msra.mxu0 %v279
    %345 = vmatprep.subr.bf16.mxu0 %v282
    %346 = vmatpush1.bf16.msra.mxu0 %v281
    %347 = vmatprep.subr.bf16.mxu0 %v284
    %348 = vmatpush1.bf16.msra.mxu0 %v283
    %349 = vmatprep.subr.bf16.mxu0 %v286
    %350 = vmatpush1.bf16.msra.mxu0 %v285
    %351 = vmatprep.subr.bf16.mxu0 %v288
    %352 = vmatpush1.bf16.msra.mxu0 %v287
    %353 = vmatprep.subr.bf16.mxu0 %v290
    %354 = vmatpush1.bf16.msra.mxu0 %v289
    %355 = vmatprep.subr.bf16.mxu0 %v292
    %356 = vmatpush1.bf16.msra.mxu0 %v291
    %357 = vmatprep.subr.bf16.mxu0 %v294
    %358 = vmatpush1.bf16.msra.mxu0 %v293
    %359 = vmatprep.subr.bf16.mxu0 %v296
    %360 = vmatpush1.bf16.msra.mxu0 %v295
    %361 = vmatprep.subr.bf16.mxu0 %v298
    %362 = vmatpush1.bf16.msra.mxu0 %v297
    %363 = vmatprep.subr.bf16.mxu0 %v300
    %364 = vmatpush1.bf16.msra.mxu0 %v299
    %365 = vmatprep.subr.bf16.mxu0 %v302
    %366 = vmatpush1.bf16.msra.mxu0 %v301
    %367 = vmatprep.subr.bf16.mxu0 %v304
    %368 = vmatpush1.bf16.msra.mxu0 %v303
    %369 = vmatprep.subr.bf16.mxu0 %v306
    %370 = vmatpush1.bf16.msra.mxu0 %v305
    %371 = vmatprep.mubr.bf16.mxu0 %v134
    %372 = vmatmul.mubr.bf16.gmra.mrb[0].mxu0 %v133
    %v373 = vpop.f32.mrb[0].mxu0
    %v374 = vadd.f32 %v172, %v373
    %v375 = vpop.f32.mrb[0].mxu0
    %v376 = vadd.f32 %v176, %v375
    %v377 = vpop.f32.mrb[0].mxu0
    %v378 = vadd.f32 %v172, %v377
    %v379 = vpop.f32.mrb[0].mxu0
    %v380 = vadd.f32 %v176, %v379
    %381 = vdwg.mxu0
    %v382 = vmax.f32 %v374, 0.0
    %v383 = vmax.f32 %v376, 0.0
    %v384 = vmax.f32 %v378, 0.0
    %v385 = vmax.f32 %v380, 0.0
    %v386 = vpack.c.bf16 %v384, %v382
    %v387 = vpack.c.bf16 %v385, %v383
    %v388 = vld [vmem:[#allocation4] sm:$0xf]
    %v389 = vld [vmem:[#allocation4 + $0x4] sm:$0xf]
    %v390 = vld [vmem:[#allocation4 + $0x8] sm:$0xf]
    %v391 = vld [vmem:[#allocation4 + $0xc] sm:$0xf]
    %v392 = vld [vmem:[#allocation4 + $0x10] sm:$0xf]
    %v393 = vld [vmem:[#allocation4 + $0x14] sm:$0xf]
    %v394 = vld [vmem:[#allocation4 + $0x18] sm:$0xf]
    %v395 = vld [vmem:[#allocation4 + $0x1c] sm:$0xf]
    %v396 = vld [vmem:[#allocation4 + $0x20] sm:$0xf]
    %v397 = vld [vmem:[#allocation4 + $0x24] sm:$0xf]
    %v398 = vld [vmem:[#allocation4 + $0x28] sm:$0xf]
    %v399 = vld [vmem:[#allocation4 + $0x2c] sm:$0xf]
    %v400 = vld [vmem:[#allocation4 + $0x30] sm:$0xf]
    %v401 = vld [vmem:[#allocation4 + $0x34] sm:$0xf]
    %v402 = vld [vmem:[#allocation4 + $0x38] sm:$0xf]
    %v403 = vld [vmem:[#allocation4 + $0x3c] sm:$0xf]
    %v404 = vld [vmem:[#allocation4 + $0x40] sm:$0xf]
    %v405 = vld [vmem:[#allocation4 + $0x44] sm:$0xf]
    %v406 = vld [vmem:[#allocation4 + $0x48] sm:$0xf]
    %v407 = vld [vmem:[#allocation4 + $0x4c] sm:$0xf]
    %v408 = vld [vmem:[#allocation4 + $0x50] sm:$0xf]
    %v409 = vld [vmem:[#allocation4 + $0x54] sm:$0xf]
    %v410 = vld [vmem:[#allocation4 + $0x58] sm:$0xf]
    %v411 = vld [vmem:[#allocation4 + $0x5c] sm:$0xf]
    %v412 = vld [vmem:[#allocation4 + $0x60] sm:$0xf]
    %v413 = vld [vmem:[#allocation4 + $0x64] sm:$0xf]
    %v414 = vld [vmem:[#allocation4 + $0x68] sm:$0xf]
    %v415 = vld [vmem:[#allocation4 + $0x6c] sm:$0xf]
    %v416 = vld [vmem:[#allocation4 + $0x70] sm:$0xf]
    %v417 = vld [vmem:[#allocation4 + $0x74] sm:$0xf]
    %v418 = vld [vmem:[#allocation4 + $0x78] sm:$0xf]
    %v419 = vld [vmem:[#allocation4 + $0x7c] sm:$0xf]
    %v420 = vld [vmem:[%s6] sm:$0x1]
    %v422 = vlaneseq
    %v423 = vshrl.u32 %v422, 7
    %v424 = vsub.s32 0, %v423
    %v425 = vrot.slane %v420, %v424
    %v459 = vunpack.c.l.b16 %v388
    %v460 = vunpack.c.l.b16 %v389
    %v461 = vunpack.c.l.b16 %v390
    %v462 = vunpack.c.l.b16 %v391
    %v463 = vunpack.c.l.b16 %v392
    %v464 = vunpack.c.l.b16 %v393
    %v465 = vunpack.c.l.b16 %v394
    %v466 = vunpack.c.l.b16 %v395
    %v467 = vunpack.c.l.b16 %v396
    %v468 = vunpack.c.l.b16 %v397
    %v469 = vunpack.c.l.b16 %v398
    %v470 = vunpack.c.l.b16 %v399
    %v471 = vunpack.c.l.b16 %v400
    %v472 = vunpack.c.l.b16 %v401
    %v473 = vunpack.c.l.b16 %v402
    %v474 = vunpack.c.l.b16 %v403
    %v475 = vunpack.c.l.b16 %v404
    %v476 = vunpack.c.l.b16 %v405
    %v477 = vunpack.c.l.b16 %v406
    %v478 = vunpack.c.l.b16 %v407
    %v479 = vunpack.c.l.b16 %v408
    %v480 = vunpack.c.l.b16 %v409
    %v481 = vunpack.c.l.b16 %v410
    %v482 = vunpack.c.l.b16 %v411
    %v483 = vunpack.c.l.b16 %v412
    %v484 = vunpack.c.l.b16 %v413
    %v485 = vunpack.c.l.b16 %v414
    %v486 = vunpack.c.l.b16 %v415
    %v487 = vunpack.c.l.b16 %v416
    %v488 = vunpack.c.l.b16 %v417
    %v489 = vunpack.c.l.b16 %v418
    %v490 = vunpack.c.l.b16 %v419
    %v491 = vpack.c.b16 %v460, %v459
    %v492 = vpack.c.b16 %v462, %v461
    %v493 = vpack.c.b16 %v464, %v463
    %v494 = vpack.c.b16 %v466, %v465
    %v495 = vpack.c.b16 %v468, %v467
    %v496 = vpack.c.b16 %v470, %v469
    %v497 = vpack.c.b16 %v472, %v471
    %v498 = vpack.c.b16 %v474, %v473
    %v499 = vpack.c.b16 %v476, %v475
    %v500 = vpack.c.b16 %v478, %v477
    %v501 = vpack.c.b16 %v480, %v479
    %v502 = vpack.c.b16 %v482, %v481
    %v503 = vpack.c.b16 %v484, %v483
    %v504 = vpack.c.b16 %v486, %v485
    %v505 = vpack.c.b16 %v488, %v487
    %v506 = vpack.c.b16 %v490, %v489
    %523 = vmatprep.subr.bf16.mxu0 0
    %524 = vmatpush1.bf16.msra.mxu0 %v491
    %525 = vmatprep.subr.bf16.mxu0 0
    %526 = vmatpush1.bf16.msra.mxu0 %v492
    %527 = vmatprep.subr.bf16.mxu0 0
    %528 = vmatpush1.bf16.msra.mxu0 %v493
    %529 = vmatprep.subr.bf16.mxu0 0
    %530 = vmatpush1.bf16.msra.mxu0 %v494
    %531 = vmatprep.subr.bf16.mxu0 0
    %532 = vmatpush1.bf16.msra.mxu0 %v495
    %533 = vmatprep.subr.bf16.mxu0 0
    %534 = vmatpush1.bf16.msra.mxu0 %v496
    %535 = vmatprep.subr.bf16.mxu0 0
    %536 = vmatpush1.bf16.msra.mxu0 %v497
    %537 = vmatprep.subr.bf16.mxu0 0
    %538 = vmatpush1.bf16.msra.mxu0 %v498
    %539 = vmatprep.subr.bf16.mxu0 0
    %540 = vmatpush1.bf16.msra.mxu0 %v499
    %541 = vmatprep.subr.bf16.mxu0 0
    %542 = vmatpush1.bf16.msra.mxu0 %v500
    %543 = vmatprep.subr.bf16.mxu0 0
    %544 = vmatpush1.bf16.msra.mxu0 %v501
    %545 = vmatprep.subr.bf16.mxu0 0
    %546 = vmatpush1.bf16.msra.mxu0 %v502
    %547 = vmatprep.subr.bf16.mxu0 0
    %548 = vmatpush1.bf16.msra.mxu0 %v503
    %549 = vmatprep.subr.bf16.mxu0 0
    %550 = vmatpush1.bf16.msra.mxu0 %v504
    %551 = vmatprep.subr.bf16.mxu0 0
    %552 = vmatpush1.bf16.msra.mxu0 %v505
    %553 = vmatprep.subr.bf16.mxu0 0
    %554 = vmatpush1.bf16.msra.mxu0 %v506
    %555 = vmatprep.mubr.bf16.mxu0 %v387
    %556 = vmatmul.mubr.bf16.gmra.mrb[0].mxu0 %v386
    %v557 = vpop.f32.mrb[0].mxu0
    %v558 = vadd.f32 %v425, %v557
    %v559 = vpop.f32.mrb[0].mxu0
    %v560 = vpop.f32.mrb[0].mxu0
    %v561 = vadd.f32 %v425, %v560
    %v562 = vpop.f32.mrb[0].mxu0
    %563 = vdwg.mxu0
    %v564 = vtanh.pop %v558
    %v565 = vtanh.pop %v561
    %566 = vst [vmem:[%s7] sm:$0xff] %v564
    %567 = vst [vmem:[%s7 + $0x8] sm:$0xff] %v565
    // Predicated region
    $region38: #{actor_forward.1} parent=1 // pred_check
      _
    $region39: #{actor_forward.1} parent=1 // pred_check_branch
      %569 = sbr.rel (0) target = $region41
    $region40: #{actor_forward.1} parent=1 // pred_region
      _
    $region41: #{actor_forward.1} parent=1 // pred_fallthru
      _
    // Predicated region
    $region42: #{actor_forward.1} parent=1 // pred_check
      _
    $region43: #{actor_forward.1} parent=1 // pred_check_branch
      %571 = sbr.rel (0) target = $region45
    $region44: #{actor_forward.1} parent=1 // pred_region
      _
    $region45: #{actor_forward.1} parent=1 // pred_fallthru
      _
    %572 = vsyncpa [#allocation3], 1
    %573 = vsyncpa [#allocation5], 1

</llo_original>
